<compile_context>
chip_gen: v7x
topology: tpu7x:2x2x1
jax: 0.10.0
libtpu: 0.0.40
codegen_flags: <defaults>
</compile_context>

<pallas_src>
import functools

import numpy as np

import jax
import jax.numpy as jnp
from jax.experimental import pallas as pl
from jax.experimental.pallas import tpu as pltpu


def _round_up(x, m):
    return ((x + m - 1) // m) * m


def _soft_topk_gate_kernel(s_ref, bd_ref, o_ref, *, inv_tau, s_dim):
    """Segmented softmax over aligned groups of `s_dim` lanes of a (tile_r, 128) block."""
    x = s_ref[...].astype(jnp.float32) * inv_tau              # (tile_r, 128) f32
    n_lanes = x.shape[-1]                                      # 128

    # Single-vreg lane iota; the partner mask is identical on every sublane and
    # every grid step, so compute it at (1, 128) and let jnp.where broadcast it
    # over rows.  The iota is rolled with the SAME primitive as the data, so
    # correctness does not depend on the roll direction convention, and wrapped
    # (cross-vreg-edge) values are never selected.
    lane = jax.lax.broadcasted_iota(jnp.int32, (1, n_lanes), 1)

    # Segmented MAX via XOR butterfly (XLU).  Unrolled at trace time.
    m = x
    d = 1
    while d < s_dim:
        take_pos = pltpu.roll(lane, d, axis=1) == (lane ^ d)   # (1, 128) bool
        v_pos = pltpu.roll(m, d, axis=1)
        v_neg = pltpu.roll(m, n_lanes - d, axis=1)             # == roll by -d
        m = jnp.maximum(m, jnp.where(take_pos, v_pos, v_neg))
        d *= 2

    e = jnp.exp(x - m)                                          # <= 1, denom >= 1

    # Segmented SUM on the MXU: block-diagonal ones matmul broadcasts each
    # group's sum to all of its lanes.  Keep operands f32 (accuracy budget).
    denom = jnp.dot(e, bd_ref[...], preferred_element_type=jnp.float32)

    # Exact normalization (approx reciprocal previously broke the sum-to-1
    # tolerance at tau=0.01).
    o_ref[...] = (e / denom).astype(o_ref.dtype)


def soft_topk_gate(s, *, tau=0.01, block_rows=4096):
    """Pallas implementation of SoftTopKGate.forward: softmax(s / tau, axis=-1).

    s: (batch, s_dim); s_dim must be a power of two <= 128 (it is 8 in the
    reference module).  Returns an array of the same shape/dtype.
    """
    B, S = s.shape
    assert S >= 1 and (S & (S - 1)) == 0 and S <= 128, (
        "s_dim must be a power of two <= 128 for the lane-packed kernel")

    group = 128 // S                       # batch rows packed into one 128-lane row
    rows = -(-B // group)                  # packed rows needed for the real batch

    if rows <= block_rows:
        # Split into >= 2 grid steps when possible so both v7x TensorCores work.
        tile_r = min(block_rows, max(8, _round_up(-(-rows // 2), 8)))
    else:
        tile_r = block_rows                # per-gen tuning knob (see review)
    rows_pad = _round_up(rows, tile_r)
    b_pad = rows_pad * group

    if b_pad != B:
        # Zero padding is safe: each batch row owns its own aligned S-lane
        # group, padded groups yield a uniform softmax and are sliced off.
        s = jnp.pad(s, ((0, b_pad - B), (0, 0)))
    packed = s.reshape(rows_pad, 128)      # free, contiguous (row-major) reshape

    # (128,128) block-diagonal ones (SxS blocks); index_map is constant so the
    # 64 KiB block is only fetched once, not re-DMA'd per grid step.
    idx = np.arange(128)
    block_diag = jnp.asarray(
        (idx[:, None] // S == idx[None, :] // S).astype(np.float32))

    out = pl.pallas_call(
        functools.partial(_soft_topk_gate_kernel, inv_tau=1.0 / tau, s_dim=S),
        out_shape=jax.ShapeDtypeStruct((rows_pad, 128), s.dtype),
        grid=(rows_pad // tile_r,),
        in_specs=[
            pl.BlockSpec((tile_r, 128), lambda i: (i, 0)),
            pl.BlockSpec((128, 128), lambda i: (0, 0)),
        ],
        out_specs=pl.BlockSpec((tile_r, 128), lambda i: (i, 0)),
        compiler_params=pltpu.CompilerParams(
            dimension_semantics=("parallel",)),   # megacore sharding on v7x
    )(packed, block_diag)

    return out.reshape(b_pad, S)[:B]


if __name__ == "__main__":
    # Module config from the reference script: s_dim = 8, k = 2, tau = 0.01,
    # batch_size = 300 (not a multiple of 16 -> exercises the padding path).
    s_dim = 8
    tau = 0.01
    batch = 300

    key = jax.random.PRNGKey(0)
    s = jax.random.normal(key, (batch, s_dim), dtype=jnp.float32)

    g = jax.block_until_ready(soft_topk_gate(s, tau=tau))

    # Reference (same semantics as torch.softmax(s / tau, dim=-1)).
    g_ref = jax.nn.softmax(s / tau, axis=-1)
    assert g.shape == (batch, s_dim)
    assert g.dtype == s.dtype
    assert jnp.allclose(g, g_ref, atol=1e-4, rtol=1e-4)
    assert jnp.allclose(jnp.sum(g, axis=-1), 1.0, atol=1e-4)

    print("KERNEL_OK")
</pallas_src>

<mosaic_0001>
module attributes {stable_mosaic.version = 11 : i64} {
  func.func @_soft_topk_gate_kernel(%arg0: i32, %arg1: memref<16x128xf32, #tpu.memory_space<vmem>>, %arg2: memref<128x128xf32, #tpu.memory_space<vmem>>, %arg3: memref<16x128xf32, #tpu.memory_space<vmem>>) attributes {dimension_semantics = [#tpu.dimension_semantics<parallel>], iteration_bounds = array<i64: 2>, scalar_prefetch = 0 : i64, scratch_operands = 0 : i64, tpu.core_type = #tpu.core_type<tc>, window_params = [{transform_indices = @transform_0, window_bounds = array<i64: 16, 128>}, {pipeline_mode = #tpu.pipeline_mode<synchronous>, transform_indices = @transform_1, window_bounds = array<i64: 128, 128>}, {transform_indices = @transform_2, window_bounds = array<i64: 16, 128>}]} {
    %c0 = arith.constant 0 : index
    %c0_0 = arith.constant 0 : index
    %0 = vector.load %arg1[%c0, %c0_0] : memref<16x128xf32, #tpu.memory_space<vmem>>, vector<16x128xf32>
    %cst = arith.constant 1.000000e+02 : f32
    %1 = vector.broadcast %cst : f32 to vector<16x128xf32>
    %2 = arith.mulf %0, %1 : vector<16x128xf32>
    %3 = tpu.iota {dimensions = array<i32: 1>} : vector<1x128xi32>
    %c1_i32 = arith.constant 1 : i32
    %4 = tpu.dynamic_rotate %3 by %c1_i32 dim 1 : vector<1x128xi32>, i32 -> vector<1x128xi32>
    %c1_i32_1 = arith.constant 1 : i32
    %5 = vector.broadcast %c1_i32_1 : i32 to vector<1x128xi32>
    %6 = arith.xori %3, %5 : vector<1x128xi32>
    %7 = arith.cmpi eq, %4, %6 : vector<1x128xi32>
    %c1_i32_2 = arith.constant 1 : i32
    %8 = tpu.dynamic_rotate %2 by %c1_i32_2 dim 1 : vector<16x128xf32>, i32 -> vector<16x128xf32>
    %c127_i32 = arith.constant 127 : i32
    %9 = tpu.dynamic_rotate %2 by %c127_i32 dim 1 : vector<16x128xf32>, i32 -> vector<16x128xf32>
    %10 = vector.shape_cast %7 : vector<1x128xi1> to vector<1x128xi1>
    %11 = vector.broadcast %10 : vector<1x128xi1> to vector<16x128xi1>
    %12 = arith.select %11, %8, %9 : vector<16x128xi1>, vector<16x128xf32>
    %13 = arith.maximumf %2, %12 : vector<16x128xf32>
    %c2_i32 = arith.constant 2 : i32
    %14 = tpu.dynamic_rotate %3 by %c2_i32 dim 1 : vector<1x128xi32>, i32 -> vector<1x128xi32>
    %c2_i32_3 = arith.constant 2 : i32
    %15 = vector.broadcast %c2_i32_3 : i32 to vector<1x128xi32>
    %16 = arith.xori %3, %15 : vector<1x128xi32>
    %17 = arith.cmpi eq, %14, %16 : vector<1x128xi32>
    %c2_i32_4 = arith.constant 2 : i32
    %18 = tpu.dynamic_rotate %13 by %c2_i32_4 dim 1 : vector<16x128xf32>, i32 -> vector<16x128xf32>
    %c126_i32 = arith.constant 126 : i32
    %19 = tpu.dynamic_rotate %13 by %c126_i32 dim 1 : vector<16x128xf32>, i32 -> vector<16x128xf32>
    %20 = vector.shape_cast %17 : vector<1x128xi1> to vector<1x128xi1>
    %21 = vector.broadcast %20 : vector<1x128xi1> to vector<16x128xi1>
    %22 = arith.select %21, %18, %19 : vector<16x128xi1>, vector<16x128xf32>
    %23 = arith.maximumf %13, %22 : vector<16x128xf32>
    %c4_i32 = arith.constant 4 : i32
    %24 = tpu.dynamic_rotate %3 by %c4_i32 dim 1 : vector<1x128xi32>, i32 -> vector<1x128xi32>
    %c4_i32_5 = arith.constant 4 : i32
    %25 = vector.broadcast %c4_i32_5 : i32 to vector<1x128xi32>
    %26 = arith.xori %3, %25 : vector<1x128xi32>
    %27 = arith.cmpi eq, %24, %26 : vector<1x128xi32>
    %c4_i32_6 = arith.constant 4 : i32
    %28 = tpu.dynamic_rotate %23 by %c4_i32_6 dim 1 : vector<16x128xf32>, i32 -> vector<16x128xf32>
    %c124_i32 = arith.constant 124 : i32
    %29 = tpu.dynamic_rotate %23 by %c124_i32 dim 1 : vector<16x128xf32>, i32 -> vector<16x128xf32>
    %30 = vector.shape_cast %27 : vector<1x128xi1> to vector<1x128xi1>
    %31 = vector.broadcast %30 : vector<1x128xi1> to vector<16x128xi1>
    %32 = arith.select %31, %28, %29 : vector<16x128xi1>, vector<16x128xf32>
    %33 = arith.maximumf %23, %32 : vector<16x128xf32>
    %34 = arith.subf %2, %33 : vector<16x128xf32>
    %35 = math.exp %34 : vector<16x128xf32>
    %c0_7 = arith.constant 0 : index
    %c0_8 = arith.constant 0 : index
    %36 = vector.load %arg2[%c0_7, %c0_8] : memref<128x128xf32, #tpu.memory_space<vmem>>, vector<128x128xf32>
    %cst_9 = arith.constant dense<0.000000e+00> : vector<16x128xf32>
    %37 = tpu.matmul %35, %36, %cst_9 {dimension_numbers = #tpu.dot_dimension_numbers<[1], [0], [0], [1], [0, 0, 1, 1], [], []>} : vector<16x128xf32>, vector<128x128xf32>, vector<16x128xf32> -> vector<16x128xf32>
    %38 = arith.divf %35, %37 : vector<16x128xf32>
    %c0_10 = arith.constant 0 : index
    %c0_11 = arith.constant 0 : index
    %39 = vector.load %arg3[%c0_10, %c0_11] : memref<16x128xf32, #tpu.memory_space<vmem>>, vector<16x128xf32>
    tpu.vector_store %arg3[%c0_10, %c0_11], %38 {strides = array<i32>} : memref<16x128xf32, #tpu.memory_space<vmem>>, vector<16x128xf32>,
    return
  }
  func.func @transform_0(%arg0: i32) -> (i32, i32) {
    %c0_i32 = arith.constant 0 : i32
    %c0_i32_0 = arith.constant 0 : i32
    return %arg0, %c0_i32 : i32, i32
  }
  func.func @transform_1(%arg0: i32) -> (i32, i32) {
    %c0_i32 = arith.constant 0 : i32
    %c0_i32_0 = arith.constant 0 : i32
    %c0_i32_1 = arith.constant 0 : i32
    return %c0_i32, %c0_i32_0 : i32, i32
  }
  func.func @transform_2(%arg0: i32) -> (i32, i32) {
    %c0_i32 = arith.constant 0 : i32
    %c0_i32_0 = arith.constant 0 : i32
    return %arg0, %c0_i32 : i32, i32
  }
}

</mosaic_0001>

<llo_original>
// kernel: tpu_custom_call.1
$region0: #{tpu_custom_call.1}
  #allocation0 [shape = 'u32[]', space=smem, size = 0x4, offset = 0x4, fixed_abs, tag = 'smem constant byte address 0x4 - core index']
  #allocation1 [shape = 'u32[144,128]{1,0:T(1,128)}', space=vmem, size = 0x12000, scoped, tag = 'internal scratch']
  %s0 = inlined_call_operand.hbm [shape: f32[32,128], index: 0, kind: input, shape index: {}]
  %s1 = inlined_call_operand.hbm [shape: f32[128,128], index: 1, kind: input, shape index: {}]
  %s2 = inlined_call_operand.hbm [shape: f32[32,128], index: 2, kind: output, shape index: {}]
  %s3 = sld [smem:[#allocation0]]
  $region49: #{tpu_custom_call.1} parent=0
    _
  %s5 = ssub.s32 1, %s3
  %s6 = scalar_select 0, %s5, %s3
  $region1: #{tpu_custom_call.1} parent=0
    #allocation2 [shape = 'u8[16384]{0}', space=vmem, size = 0x4000, scoped, tag = 'input window, operand 0']
    #allocation3 [shape = 's32[2]{0}', space=sflag, size = 0x8, scoped, tag = 'scoped memory for tpu_custom_call.1']
    #allocation4 [shape = 's32[2]{0}', space=sflag, size = 0x8, scoped, tag = 'scoped memory for tpu_custom_call.1']
    #allocation5 [shape = 'u8[65536]{0}', space=vmem, size = 0x10000, scoped, tag = 'input window, operand 1, single buffered']
    #allocation6 [shape = 's32[1]{0}', space=sflag, size = 0x4, scoped, tag = 'scoped memory for tpu_custom_call.1']
    #allocation7 [shape = 'u8[16384]{0}', space=vmem, size = 0x4000, scoped, tag = 'output window, operand 0']
    %7 = vsyncpa [#allocation3], 0
    %s8 = scalar_lea.sflag [#allocation3], 1
    %9 = vsyncpa %s8, 0
    %10 = vsyncpa [#allocation6], 0
    %11 = vsyncpa [#allocation4], 0
    %s12 = scalar_lea.sflag [#allocation4], 1
    %13 = vsyncpa %s12, 0
    loop: start=0, step=1, limit=4
    $region2: #{tpu_custom_call.1} parent=1 // loop_pre_header
      _
    $region3: #{tpu_custom_call.1} parent=1 // loop_header
      %s15 = sphi 0, %s19
      %p16 = scmp.ge.s32.totalorder %s15, 4
      %s25 = sphi 0, %s27
      %s28 = sphi 0, %s25
      %s29 = sphi 0, %s28
      %s45 = sphi 0, %s29
      %s49 = sphi 0, %s49
      %s51 = sphi 0, %s49
      %s52 = sphi 0, %s51
      %s66 = sphi 0, %s52
      %s72 = sphi 0, %s74
      %s75 = sphi 0, %s72
      %s76 = sphi 0, %s75
      %s92 = sphi 0, %s76
    $region4: #{tpu_custom_call.1} parent=1 // loop_header_branch
      %18 = sbr.rel (%p16) target = $region8
    $region5: #{tpu_custom_call.1} parent=1 // loop_body
      %s20 = ssub.s32 %s15, 1
      %s21 = ssub.s32 %s15, 2
      %s22 = sadd.s32 %s15, 1
      %s23 = ssub.s32 %s15, %s22
      %p24 = scmp.eq.s32.totalorder %s23, 0
      %s26 = sadd.s32 %s25, 1
      %s27 = scalar_select %p24, %s25, %s26
      %p30 = pneg %p24
      %p31 = scmp.eq.s32.totalorder %s15, 1
      %p32 = por %p30, %p31
      %p33 = scmp.ne.s32.totalorder %s25, %s28
      %p34 = scmp.eq.s32.totalorder %s15, 0
      %p35 = por %p33, %p34
      %p36 = scmp.ne.s32.totalorder %s25, %s28
      %p37 = scmp.eq.s32.totalorder %s20, 1
      %p38 = por %p36, %p37
      %p39 = scmp.ne.s32.totalorder %s28, %s29
      %p40 = scmp.eq.s32.totalorder %s20, 0
      %p41 = por %p39, %p40
      %p42 = scmp.ne.s32.totalorder %s28, %s29
      %p43 = scmp.eq.s32.totalorder %s21, 1
      %p44 = por %p42, %p43
      %p46 = scmp.ne.s32.totalorder %s29, %s45
      %p47 = scmp.eq.s32.totalorder %s21, 0
      %p48 = por %p46, %p47
      %s50 = sadd.s32 %s49, 1
      %p53 = scmp.eq.s32.totalorder %s15, 1
      %p54 = scmp.ne.s32.totalorder %s49, %s51
      %p55 = scmp.eq.s32.totalorder %s15, 0
      %p56 = por %p54, %p55
      %p57 = scmp.ne.s32.totalorder %s49, %s51
      %p58 = scmp.eq.s32.totalorder %s20, 1
      %p59 = por %p57, %p58
      %p60 = scmp.ne.s32.totalorder %s51, %s52
      %p61 = scmp.eq.s32.totalorder %s20, 0
      %p62 = por %p60, %p61
      %p63 = scmp.ne.s32.totalorder %s51, %s52
      %p64 = scmp.eq.s32.totalorder %s21, 1
      %p65 = por %p63, %p64
      %p67 = scmp.ne.s32.totalorder %s52, %s66
      %p68 = scmp.eq.s32.totalorder %s21, 0
      %p69 = por %p67, %p68
      %s70 = ssub.s32 %s15, %s22
      %p71 = scmp.eq.s32.totalorder %s70, 0
      %s73 = sadd.s32 %s72, 1
      %s74 = scalar_select %p71, %s72, %s73
      %p77 = pneg %p71
      %p78 = scmp.eq.s32.totalorder %s15, 1
      %p79 = por %p77, %p78
      %p80 = scmp.ne.s32.totalorder %s72, %s75
      %p81 = scmp.eq.s32.totalorder %s15, 0
      %p82 = por %p80, %p81
      %p83 = scmp.ne.s32.totalorder %s72, %s75
      %p84 = scmp.eq.s32.totalorder %s20, 1
      %p85 = por %p83, %p84
      %p86 = scmp.ne.s32.totalorder %s75, %s76
      %p87 = scmp.eq.s32.totalorder %s20, 0
      %p88 = por %p86, %p87
      %p89 = scmp.ne.s32.totalorder %s75, %s76
      %p90 = scmp.eq.s32.totalorder %s21, 1
      %p91 = por %p89, %p90
      %p93 = scmp.ne.s32.totalorder %s76, %s92
      %p94 = scmp.eq.s32.totalorder %s21, 0
      %p95 = por %p93, %p94
      %p96 = scmp.le.s32.totalorder 1, %s15
      %p97 = scmp.lt.s32.totalorder %s15, 3
      %p98 = pnand %p96, %p97
      %p99 = pneg %p98
      // Predicated region
      $region9: #{tpu_custom_call.1} parent=5 // pred_check
        _
      $region10: #{tpu_custom_call.1} parent=5 // pred_check_branch
        %101 = sbr.rel (%p98) target = $region12
      $region11: #{tpu_custom_call.1} parent=5 // pred_region
        %s102 = ssub.s32 %s15, 1
        // Predicated region
        $region13: #{tpu_custom_call.1} parent=11 // pred_check
          %p103 = pneg %p62
        $region14: #{tpu_custom_call.1} parent=11 // pred_check_branch
          %105 = sbr.rel (%p103) target = $region16
        $region15: #{tpu_custom_call.1} parent=11 // pred_region
          %s107 = ssub.s32 2048, 2048
          %108 = vsyncadd [#allocation6], %s107
          %s109 = sshll.u32 [#allocation5], 4
          %s110 = int_to_ptr.vmem [resolvable:$true] %s109
          %115 = dma.hbm_to_vmem [thread:$0]  %s1, 2048, %s110, [#allocation6], 128, 128, 8
        $region16: #{tpu_custom_call.1} parent=11 // pred_fallthru
          _
      $region12: #{tpu_custom_call.1} parent=5 // pred_fallthru
        _
      %p116 = scmp.lt.s32.totalorder %s15, 2
      // Predicated region
      $region17: #{tpu_custom_call.1} parent=5 // pred_check
        %p117 = pneg %p116
      $region18: #{tpu_custom_call.1} parent=5 // pred_check_branch
        %119 = sbr.rel (%p117) target = $region20
      $region19: #{tpu_custom_call.1} parent=5 // pred_region
        // Predicated region
        $region21: #{tpu_custom_call.1} parent=19 // pred_check
          %p120 = pneg %p35
        $region22: #{tpu_custom_call.1} parent=19 // pred_check_branch
          %122 = sbr.rel (%p120) target = $region24
        $region23: #{tpu_custom_call.1} parent=19 // pred_region
          %s123 = sand.u32 %s25, 1
          %s124 = scalar_lea.sflag [#allocation3], %s123
          %s125 = sand.u32 %s25, 1
          %s126 = smul.addr %s125, 16
          %s127 = scalar_lea.vmem [#allocation2], %s126
          %s128 = smul.u32 2, %s15
          %s130 = ssub.s32 256, 256
          %131 = vsyncadd %s124, %s130
          %s132 = smul.addr %s128, 128
          %s133 = scalar_lea.hbm %s0, %s132
          %s134 = sshll.u32 %s127, 4
          %s135 = int_to_ptr.vmem [resolvable:$true] %s134
          %140 = dma.hbm_to_vmem [thread:$0]  %s133, 256, %s135, %s124, 128, 128, 8
        $region24: #{tpu_custom_call.1} parent=19 // pred_fallthru
          _
      $region20: #{tpu_custom_call.1} parent=5 // pred_fallthru
        _
      %p141 = scmp.le.s32.totalorder 1, %s15
      %p142 = scmp.lt.s32.totalorder %s15, 3
      %p143 = pnand %p141, %p142
      %p144 = pneg %p143
      // Predicated region
      $region25: #{tpu_custom_call.1} parent=5 // pred_check
        _
      $region26: #{tpu_custom_call.1} parent=5 // pred_check_branch
        %146 = sbr.rel (%p143) target = $region28
      $region27: #{tpu_custom_call.1} parent=5 // pred_region
        %s147 = ssub.s32 %s15, 1
        %s148 = sand.u32 %s28, 1
        %s149 = scalar_lea.sflag [#allocation3], %s148
        %s150 = sand.u32 %s28, 1
        %s151 = smul.addr %s150, 16
        %s152 = scalar_lea.vmem [#allocation2], %s151
        // Predicated region
        $region29: #{tpu_custom_call.1} parent=27 // pred_check
          %p153 = pneg %p41
        $region30: #{tpu_custom_call.1} parent=27 // pred_check_branch
          %155 = sbr.rel (%p153) target = $region32
        $region31: #{tpu_custom_call.1} parent=27 // pred_region
          %156 = dma.done %s149, 256
        $region32: #{tpu_custom_call.1} parent=27 // pred_fallthru
          _
        // Predicated region
        $region33: #{tpu_custom_call.1} parent=27 // pred_check
          %p157 = pneg %p62
        $region34: #{tpu_custom_call.1} parent=27 // pred_check_branch
          %159 = sbr.rel (%p157) target = $region36
        $region35: #{tpu_custom_call.1} parent=27 // pred_region
          %160 = dma.done [#allocation6], 2048
        $region36: #{tpu_custom_call.1} parent=27 // pred_fallthru
          _
        %s161 = sand.u32 %s28, 1
        %s162 = scalar_lea.sflag [#allocation3], %s161
        %s163 = sand.u32 %s28, 1
        %s164 = smul.addr %s163, 16
        %s165 = scalar_lea.vmem [#allocation2], %s164
        %p166 = pneg %p41
        %p167 = pneg %p38
        %p168 = pneg %p62
        %p169 = pneg %p59
        %p170 = pneg %p88
        %p171 = pneg %p85
        %s172 = sand.u32 %s75, 1
        %s173 = scalar_lea.sflag [#allocation4], %s172
        %s174 = sand.u32 %s75, 1
        %s175 = smul.addr %s174, 16
        %s176 = scalar_lea.vmem [#allocation7], %s175
        %s177 = smul.u32 2, %s20
        %s178 = smul.u32 2, %s20
        %v179 = vld [vmem:[%s152] sm:$0xff]
        %v180 = vld [vmem:[%s152 + $0x8] sm:$0xff]
        %v181 = vmul.f32 %v179, 100.0
        %v182 = vmul.f32 %v180, 100.0
        %v183 = vlaneseq
        %v184 = vand.u32 %v183, 127
        %185 = vrot.lane.b32.xlu0 %v184, 1
        %v186 = vpop.permute.xlu0 %185
        %v187 = vxor.u32 %v184, 1
        %vm188 = vcmp.eq.s32.totalorder %v186, %v187
        %189 = vrot.lane.b32.xlu0 %v181, 1
        %v190 = vpop.permute.xlu0 %189
        %191 = vrot.lane.b32.xlu0 %v182, 1
        %v192 = vpop.permute.xlu0 %191
        %193 = vrot.lane.b32.xlu0 %v181, 127
        %v194 = vpop.permute.xlu0 %193
        %195 = vrot.lane.b32.xlu0 %v182, 127
        %v196 = vpop.permute.xlu0 %195
        %v197 = vsel %vm188, 1, 0
        %v198 = vlaneseq
        %v199 = vshrl.u32 %v198, 7
        %v200 = vsub.s32 0, %v199
        %v201 = vrot.slane %v197, %v200
        %vm202 = vcmp.eq.s32.totalorder %v201, 1
        %v203 = vsel %vm202, %v190, %v194
        %v204 = vsel %vm202, %v192, %v196
        %v205 = vmax.f32 %v181, %v203
        %v206 = vmax.f32 %v182, %v204
        %207 = vrot.lane.b32.xlu0 %v184, 2
        %v208 = vpop.permute.xlu0 %207
        %v209 = vxor.u32 %v184, 2
        %vm210 = vcmp.eq.s32.totalorder %v208, %v209
        %211 = vrot.lane.b32.xlu0 %v205, 2
        %v212 = vpop.permute.xlu0 %211
        %213 = vrot.lane.b32.xlu0 %v206, 2
        %v214 = vpop.permute.xlu0 %213
        %215 = vrot.lane.b32.xlu0 %v205, 126
        %v216 = vpop.permute.xlu0 %215
        %217 = vrot.lane.b32.xlu0 %v206, 126
        %v218 = vpop.permute.xlu0 %217
        %v219 = vsel %vm210, 1, 0
        %v220 = vlaneseq
        %v221 = vshrl.u32 %v220, 7
        %v222 = vsub.s32 0, %v221
        %v223 = vrot.slane %v219, %v222
        %vm224 = vcmp.eq.s32.totalorder %v223, 1
        %v225 = vsel %vm224, %v212, %v216
        %v226 = vsel %vm224, %v214, %v218
        %v227 = vmax.f32 %v205, %v225
        %v228 = vmax.f32 %v206, %v226
        %229 = vrot.lane.b32.xlu0 %v184, 4
        %v230 = vpop.permute.xlu0 %229
        %v231 = vxor.u32 %v184, 4
        %vm232 = vcmp.eq.s32.totalorder %v230, %v231
        %233 = vrot.lane.b32.xlu0 %v227, 4
        %v234 = vpop.permute.xlu0 %233
        %235 = vrot.lane.b32.xlu0 %v228, 4
        %v236 = vpop.permute.xlu0 %235
        %237 = vrot.lane.b32.xlu0 %v227, 124
        %v238 = vpop.permute.xlu0 %237
        %239 = vrot.lane.b32.xlu0 %v228, 124
        %v240 = vpop.permute.xlu0 %239
        %v241 = vsel %vm232, 1, 0
        %v242 = vlaneseq
        %v243 = vshrl.u32 %v242, 7
        %v244 = vsub.s32 0, %v243
        %v245 = vrot.slane %v241, %v244
        %vm246 = vcmp.eq.s32.totalorder %v245, 1
        %v247 = vsel %vm246, %v234, %v238
        %v248 = vsel %vm246, %v236, %v240
        %v249 = vmax.f32 %v227, %v247
        %v250 = vmax.f32 %v228, %v248
        %v251 = vsub.f32 %v181, %v249
        %v252 = vsub.f32 %v182, %v250
        %v253 = vmul.f32 %v251, 1.442695
        %v254 = vpow.pop %v253
        %v255 = vmul.f32 %v252, 1.442695
        %v256 = vpow.pop %v255
        %v257 = vld [vmem:[#allocation5] sm:$0xff]
        %v258 = vld [vmem:[#allocation5 + $0x8] sm:$0xff]
        %v259 = vld [vmem:[#allocation5 + $0x10] sm:$0xff]
        %v260 = vld [vmem:[#allocation5 + $0x18] sm:$0xff]
        %v261 = vld [vmem:[#allocation5 + $0x20] sm:$0xff]
        %v262 = vld [vmem:[#allocation5 + $0x28] sm:$0xff]
        %v263 = vld [vmem:[#allocation5 + $0x30] sm:$0xff]
        %v264 = vld [vmem:[#allocation5 + $0x38] sm:$0xff]
        %v265 = vld [vmem:[#allocation5 + $0x40] sm:$0xff]
        %v266 = vld [vmem:[#allocation5 + $0x48] sm:$0xff]
        %v267 = vld [vmem:[#allocation5 + $0x50] sm:$0xff]
        %v268 = vld [vmem:[#allocation5 + $0x58] sm:$0xff]
        %v269 = vld [vmem:[#allocation5 + $0x60] sm:$0xff]
        %v270 = vld [vmem:[#allocation5 + $0x68] sm:$0xff]
        %v271 = vld [vmem:[#allocation5 + $0x70] sm:$0xff]
        %v272 = vld [vmem:[#allocation5 + $0x78] sm:$0xff]
        %273 = vmatprep.subr.mxu0 0.0
        %274 = vmatpush1.msra.mxu0 %v257
        %275 = vmatprep.subr.mxu0 0.0
        %276 = vmatpush1.msra.mxu0 %v258
        %277 = vmatprep.subr.mxu0 0.0
        %278 = vmatpush1.msra.mxu0 %v259
        %279 = vmatprep.subr.mxu0 0.0
        %280 = vmatpush1.msra.mxu0 %v260
        %281 = vmatprep.subr.mxu0 0.0
        %282 = vmatpush1.msra.mxu0 %v261
        %283 = vmatprep.subr.mxu0 0.0
        %284 = vmatpush1.msra.mxu0 %v262
        %285 = vmatprep.subr.mxu0 0.0
        %286 = vmatpush1.msra.mxu0 %v263
        %287 = vmatprep.subr.mxu0 0.0
        %288 = vmatpush1.msra.mxu0 %v264
        %289 = vmatprep.subr.mxu0 0.0
        %290 = vmatpush1.msra.mxu0 %v265
        %291 = vmatprep.subr.mxu0 0.0
        %292 = vmatpush1.msra.mxu0 %v266
        %293 = vmatprep.subr.mxu0 0.0
        %294 = vmatpush1.msra.mxu0 %v267
        %295 = vmatprep.subr.mxu0 0.0
        %296 = vmatpush1.msra.mxu0 %v268
        %297 = vmatprep.subr.mxu0 0.0
        %298 = vmatpush1.msra.mxu0 %v269
        %299 = vmatprep.subr.mxu0 0.0
        %300 = vmatpush1.msra.mxu0 %v270
        %301 = vmatprep.subr.mxu0 0.0
        %302 = vmatpush1.msra.mxu0 %v271
        %303 = vmatprep.subr.mxu0 0.0
        %304 = vmatpush1.msra.mxu0 %v272
        %305 = vmatprep.subr.mxu0 0.0
        %306 = vmatpush1.msra.mxu0 0.0
        %307 = vmatprep.subr.mxu0 0.0
        %308 = vmatpush1.msra.mxu0 0.0
        %309 = vmatprep.subr.mxu0 0.0
        %310 = vmatpush1.msra.mxu0 0.0
        %311 = vmatprep.subr.mxu0 0.0
        %312 = vmatpush1.msra.mxu0 0.0
        %313 = vmatprep.subr.mxu0 0.0
        %314 = vmatpush1.msra.mxu0 0.0
        %315 = vmatprep.subr.mxu0 0.0
        %316 = vmatpush1.msra.mxu0 0.0
        %317 = vmatprep.subr.mxu0 0.0
        %318 = vmatpush1.msra.mxu0 0.0
        %319 = vmatprep.subr.mxu0 0.0
        %320 = vmatpush1.msra.mxu0 0.0
        %321 = vmatprep.subr.mxu0 0.0
        %322 = vmatpush1.msra.mxu0 0.0
        %323 = vmatprep.subr.mxu0 0.0
        %324 = vmatpush1.msra.mxu0 0.0
        %325 = vmatprep.subr.mxu0 0.0
        %326 = vmatpush1.msra.mxu0 0.0
        %327 = vmatprep.subr.mxu0 0.0
        %328 = vmatpush1.msra.mxu0 0.0
        %329 = vmatprep.subr.mxu0 0.0
        %330 = vmatpush1.msra.mxu0 0.0
        %331 = vmatprep.subr.mxu0 0.0
        %332 = vmatpush1.msra.mxu0 0.0
        %333 = vmatprep.subr.mxu0 0.0
        %334 = vmatpush1.msra.mxu0 0.0
        %335 = vmatprep.subr.mxu0 0.0
        %336 = vmatpush1.msra.mxu0 0.0
        %337 = vmatprep.mubr.f32.mxu0 0.0
        %338 = vmatmul.mubr.f32.gmra.mrb[0].mxu0 %v254
        %v339 = vpop.f32.mrb[0].mxu0
        %v340 = vadd.f32 0.0, %v339
        %v341 = vpop.f32.mrb[0].mxu0
        %342 = vmatprep.mubr.f32.mxu0 0.0
        %343 = vmatmul.mubr.f32.gmra.mrb[0].mxu0 %v256
        %v344 = vpop.f32.mrb[0].mxu0
        %v345 = vadd.f32 0.0, %v344
        %v346 = vpop.f32.mrb[0].mxu0
        %347 = vdwg.mxu0
        %v348 = vrcp.pop %v340
        %v349 = vmul.f32 %v254, %v348
        %v350 = vrcp.pop %v345
        %v351 = vmul.f32 %v256, %v350
        %352 = vst [vmem:[%s176] sm:$0xff] %v349
        %353 = vst [vmem:[%s176 + $0x8] sm:$0xff] %v351
        %s354 = sand.u32 %s75, 1
        %s355 = scalar_lea.sflag [#allocation4], %s354
        %s356 = sand.u32 %s75, 1
        %s357 = smul.addr %s356, 16
        %s358 = scalar_lea.vmem [#allocation7], %s357
        // Predicated region
        $region37: #{tpu_custom_call.1} parent=27 // pred_check
          %p359 = pneg %p85
        $region38: #{tpu_custom_call.1} parent=27 // pred_check_branch
          %361 = sbr.rel (%p359) target = $region40
        $region39: #{tpu_custom_call.1} parent=27 // pred_region
          %s362 = smul.u32 2, %s20
          %s364 = ssub.s32 256, 256
          %365 = vsyncadd %s355, %s364
          %s366 = smul.addr %s362, 128
          %s367 = scalar_lea.hbm %s2, %s366
          %s368 = sshll.u32 %s358, 4
          %s369 = int_to_ptr.vmem [resolvable:$true] %s368
          %374 = dma.vmem_to_hbm [thread:$0]  %s369, 256, %s367, %s355, 128, 128, 8
        $region40: #{tpu_custom_call.1} parent=27 // pred_fallthru
          _
      $region28: #{tpu_custom_call.1} parent=5 // pred_fallthru
        _
      %p375 = scmp.le.s32.totalorder 2, %s15
      // Predicated region
      $region41: #{tpu_custom_call.1} parent=5 // pred_check
        %p376 = pneg %p375
      $region42: #{tpu_custom_call.1} parent=5 // pred_check_branch
        %378 = sbr.rel (%p376) target = $region44
      $region43: #{tpu_custom_call.1} parent=5 // pred_region
        %s379 = ssub.s32 %s15, 2
        // Predicated region
        $region45: #{tpu_custom_call.1} parent=43 // pred_check
          %p380 = pneg %p91
        $region46: #{tpu_custom_call.1} parent=43 // pred_check_branch
          %382 = sbr.rel (%p380) target = $region48
        $region47: #{tpu_custom_call.1} parent=43 // pred_region
          %s383 = sand.u32 %s76, 1
          %s384 = scalar_lea.sflag [#allocation4], %s383
          %s385 = sand.u32 %s76, 1
          %s386 = smul.addr %s385, 16
          %s387 = scalar_lea.vmem [#allocation7], %s386
          %388 = dma.done %s384, 256
        $region48: #{tpu_custom_call.1} parent=43 // pred_fallthru
          _
      $region44: #{tpu_custom_call.1} parent=5 // pred_fallthru
        _
    $region6: #{tpu_custom_call.1} parent=1 // loop_footer
      %s19 = sadd.s32 1, %s15
    $region7: #{tpu_custom_call.1} parent=1 // loop_footer_branch
      %14 = sbr.rel target = $region3
    $region8: #{tpu_custom_call.1} parent=1 // loop_exit
      _
    %389 = vsyncpa [#allocation3], 1
    %s390 = scalar_lea.sflag [#allocation3], 1
    %391 = vsyncpa %s390, 1
    %392 = vsyncpa [#allocation6], 1
    %393 = vsyncpa [#allocation4], 1
    %s394 = scalar_lea.sflag [#allocation4], 1
    %395 = vsyncpa %s394, 1

</llo_original>
